<compile_context>
chip_gen: v7x
topology: tpu7x:2x2x1
jax: 0.10.0
libtpu: 0.0.40
codegen_flags: <defaults>
</compile_context>

<pallas_src>
import jax
import jax.numpy as jnp
from jax import lax
from jax.experimental import pallas as pl
from jax.experimental.pallas import tpu as pltpu


def _round_up(x, m):
    return ((x + m - 1) // m) * m


def _gmf_onehot_kernel(u_idx_ref, i_idx_ref, user_tbl_ref, item_tbl_ref, o_ref):
    """One grid step: whole (tb, D) slab via two one-hot MXU matmuls."""
    tb = o_ref.shape[0]
    U = user_tbl_ref.shape[0]
    I = item_tbl_ref.shape[0]
    u_idx = u_idx_ref[...]                                   # (tb, 1) int32
    i_idx = i_idx_ref[...]                                   # (tb, 1) int32
    u_oh = (lax.broadcasted_iota(jnp.int32, (tb, U), 1) == u_idx
            ).astype(user_tbl_ref.dtype)                     # (tb, U)
    i_oh = (lax.broadcasted_iota(jnp.int32, (tb, I), 1) == i_idx
            ).astype(item_tbl_ref.dtype)                     # (tb, I)
    u_emb = jnp.dot(u_oh, user_tbl_ref[...],
                    preferred_element_type=jnp.float32)      # (tb, D) f32
    i_emb = jnp.dot(i_oh, item_tbl_ref[...],
                    preferred_element_type=jnp.float32)      # (tb, D) f32
    o_ref[...] = (u_emb * i_emb).astype(o_ref.dtype)         # one unmasked store


def _gmf_gather_kernel(u_idx_ref, i_idx_ref, user_tbl_ref, item_tbl_ref, o_ref):
    """Fallback for large tables: row gather, grouped into (8, D) stores."""
    tb = o_ref.shape[0]

    def body(g, carry):
        r0 = pl.multiple_of(g * 8, 8)
        rows = []
        for s in range(8):                                   # unrolled group of 8
            uid = u_idx_ref[r0 + s]                          # scalar read (SMEM)
            iid = i_idx_ref[r0 + s]
            u_row = user_tbl_ref[pl.ds(uid, 1), :].astype(jnp.float32)
            i_row = item_tbl_ref[pl.ds(iid, 1), :].astype(jnp.float32)
            rows.append(u_row * i_row)                       # multiply in f32
        # One unmasked (8, D) store instead of eight masked (1, D) stores.
        o_ref[pl.ds(r0, 8), :] = jnp.concatenate(rows, axis=0).astype(o_ref.dtype)
        return carry

    lax.fori_loop(0, tb // 8, body, 0, unroll=False)


def gmf_forward(user, item, user_table, item_table, *, tile_b=512,
                onehot_max_rows=2048, force_path=None):
    """Pallas GMF forward: returns user_table[user] * item_table[item]."""
    B = user.shape[0]
    U, D = user_table.shape
    I, Di = item_table.shape
    assert D == Di, "embedding dims must match"
    out_dtype = jnp.result_type(user_table.dtype, item_table.dtype)

    use_onehot = (force_path == "onehot"
                  or (force_path is None and max(U, I) <= onehot_max_rows))

    # Sublane-dense batch tile: multiple of 8, collapses to one step for tiny B.
    tb = min(tile_b, _round_up(B, 8))
    tb = _round_up(tb, 8)
    B_pad = _round_up(B, tb)

    user_i = user.astype(jnp.int32)
    item_i = item.astype(jnp.int32)
    pad = B_pad - B
    if pad:
        # Pad with index 0 (always valid); padded rows are sliced off below.
        user_i = jnp.pad(user_i, (0, pad))
        item_i = jnp.pad(item_i, (0, pad))

    # VMEM budget: tables counted ONCE (single-buffered whole-array operands),
    # double-buffered output tile, one-hot temporaries, small headroom.
    itemsize_u = jnp.dtype(user_table.dtype).itemsize
    itemsize_i = jnp.dtype(item_table.dtype).itemsize
    itemsize_o = jnp.dtype(out_dtype).itemsize
    needed = (U * D * itemsize_u + I * D * itemsize_i
              + 2 * tb * D * itemsize_o)
    if use_onehot:
        needed += 2 * tb * (U + I) * 4 + 4 * tb * 4
    try:  # chip-aware cap (v7x has only 64 MiB/core; v5e/v6e have 128 MiB)
        cap = int(0.75 * pltpu.get_tpu_info().vmem_capacity_bytes)
    except Exception:
        cap = 48 << 20
    vmem_limit = int(min(max(needed + (4 << 20), 16 << 20), cap))

    grid = (B_pad // tb,)
    # Whole-array VMEM operands: fetched once, no double buffering.
    table_spec = pl.BlockSpec(memory_space=pltpu.MemorySpace.VMEM)
    out_spec = pl.BlockSpec((tb, D), lambda b: (b, 0))

    if use_onehot:
        kernel = _gmf_onehot_kernel
        idx_args = (user_i.reshape(B_pad, 1), item_i.reshape(B_pad, 1))
        idx_spec = pl.BlockSpec((tb, 1), lambda b: (b, 0))
    else:
        kernel = _gmf_gather_kernel
        idx_args = (user_i, item_i)
        idx_spec = pl.BlockSpec((tb,), lambda b: (b,),
                                memory_space=pltpu.MemorySpace.SMEM)

    out = pl.pallas_call(
        kernel,
        out_shape=jax.ShapeDtypeStruct((B_pad, D), out_dtype),
        grid=grid,
        in_specs=[idx_spec, idx_spec, table_spec, table_spec],
        out_specs=out_spec,
        compiler_params=pltpu.CompilerParams(
            dimension_semantics=("parallel",),   # independent batch tiles
            vmem_limit_bytes=vmem_limit,
        ),
    )(*idx_args, user_table, item_table)

    return out[:B]


if __name__ == "__main__":
    user_num, item_num, output_dim = 16, 32, 128   # embedding dim on lane axis

    key = jax.random.PRNGKey(0)
    k_u, k_i, k_uid, k_iid = jax.random.split(key, 4)

    # nn.init.normal_(std=0.01) equivalent, deterministic.
    user_table = (0.01 * jax.random.normal(k_u, (user_num, output_dim))
                  ).astype(jnp.float32)
    item_table = (0.01 * jax.random.normal(k_i, (item_num, output_dim))
                  ).astype(jnp.float32)

    # 1) Small batch, single tile, one-hot MXU path.
    batch = 8
    user = jax.random.randint(k_uid, (batch,), 0, user_num, dtype=jnp.int32)
    item = jax.random.randint(k_iid, (batch,), 0, item_num, dtype=jnp.int32)
    out = jax.block_until_ready(gmf_forward(user, item, user_table, item_table))
    ref = user_table[user] * item_table[item]
    assert out.shape == (batch, output_dim)
    assert jnp.allclose(out, ref, atol=1e-6), "mismatch (one-hot, small)"

    # 2) Batch not a multiple of the tile -> padding + multi-step grid (one-hot).
    batch2 = 200
    k_uid2, k_iid2 = jax.random.split(k_uid)
    user2 = jax.random.randint(k_uid2, (batch2,), 0, user_num, dtype=jnp.int32)
    item2 = jax.random.randint(k_iid2, (batch2,), 0, item_num, dtype=jnp.int32)
    out2 = jax.block_until_ready(
        gmf_forward(user2, item2, user_table, item_table, tile_b=64))
    ref2 = user_table[user2] * item_table[item2]
    assert out2.shape == (batch2, output_dim)
    assert jnp.allclose(out2, ref2, atol=1e-6), "mismatch (one-hot, tiled)"

    # 3) Force the large-table fallback (grouped-8 gather) on the same inputs.
    out3 = jax.block_until_ready(
        gmf_forward(user2, item2, user_table, item_table, tile_b=64,
                    force_path="loop"))
    assert jnp.allclose(out3, ref2, atol=1e-6), "mismatch (gather fallback)"

    print("KERNEL_OK")
</pallas_src>

<mosaic_0001>
module attributes {stable_mosaic.version = 11 : i64} {
  func.func @_gmf_onehot_kernel(%arg0: i32, %arg1: memref<8x1xi32, #tpu.memory_space<vmem>>, %arg2: memref<8x1xi32, #tpu.memory_space<vmem>>, %arg3: memref<16x128xf32, #tpu.memory_space<vmem>>, %arg4: memref<32x128xf32, #tpu.memory_space<vmem>>, %arg5: memref<8x128xf32, #tpu.memory_space<vmem>>) attributes {dimension_semantics = [#tpu.dimension_semantics<parallel>], iteration_bounds = array<i64: 1>, scalar_prefetch = 0 : i64, scratch_operands = 0 : i64, tpu.core_type = #tpu.core_type<tc>, window_params = [{transform_indices = @transform_0, window_bounds = array<i64: 8, 1>}, {transform_indices = @transform_1, window_bounds = array<i64: 8, 1>}, {pipeline_mode = #tpu.pipeline_mode<synchronous>, transform_indices = @transform_2, window_bounds = array<i64: 16, 128>}, {pipeline_mode = #tpu.pipeline_mode<synchronous>, transform_indices = @transform_3, window_bounds = array<i64: 32, 128>}, {transform_indices = @transform_4, window_bounds = array<i64: 8, 128>}]} {
    %c0 = arith.constant 0 : index
    %c0_0 = arith.constant 0 : index
    %0 = vector.load %arg1[%c0, %c0_0] : memref<8x1xi32, #tpu.memory_space<vmem>>, vector<8x1xi32>
    %c0_1 = arith.constant 0 : index
    %c0_2 = arith.constant 0 : index
    %1 = vector.load %arg2[%c0_1, %c0_2] : memref<8x1xi32, #tpu.memory_space<vmem>>, vector<8x1xi32>
    %2 = tpu.iota {dimensions = array<i32: 1>} : vector<8x16xi32>
    %3 = vector.broadcast %0 : vector<8x1xi32> to vector<8x16xi32>
    %4 = arith.cmpi eq, %2, %3 : vector<8x16xi32>
    %5 = arith.extui %4 : vector<8x16xi1> to vector<8x16xi32>
    %6 = arith.sitofp %5 : vector<8x16xi32> to vector<8x16xf32>
    %7 = tpu.iota {dimensions = array<i32: 1>} : vector<8x32xi32>
    %8 = vector.broadcast %1 : vector<8x1xi32> to vector<8x32xi32>
    %9 = arith.cmpi eq, %7, %8 : vector<8x32xi32>
    %10 = arith.extui %9 : vector<8x32xi1> to vector<8x32xi32>
    %11 = arith.sitofp %10 : vector<8x32xi32> to vector<8x32xf32>
    %c0_3 = arith.constant 0 : index
    %c0_4 = arith.constant 0 : index
    %12 = vector.load %arg3[%c0_3, %c0_4] : memref<16x128xf32, #tpu.memory_space<vmem>>, vector<16x128xf32>
    %cst = arith.constant dense<0.000000e+00> : vector<8x128xf32>
    %13 = tpu.matmul %6, %12, %cst {dimension_numbers = #tpu.dot_dimension_numbers<[1], [0], [0], [1], [0, 0, 1, 1], [], []>} : vector<8x16xf32>, vector<16x128xf32>, vector<8x128xf32> -> vector<8x128xf32>
    %c0_5 = arith.constant 0 : index
    %c0_6 = arith.constant 0 : index
    %14 = vector.load %arg4[%c0_5, %c0_6] : memref<32x128xf32, #tpu.memory_space<vmem>>, vector<32x128xf32>
    %cst_7 = arith.constant dense<0.000000e+00> : vector<8x128xf32>
    %15 = tpu.matmul %11, %14, %cst_7 {dimension_numbers = #tpu.dot_dimension_numbers<[1], [0], [0], [1], [0, 0, 1, 1], [], []>} : vector<8x32xf32>, vector<32x128xf32>, vector<8x128xf32> -> vector<8x128xf32>
    %16 = arith.mulf %13, %15 : vector<8x128xf32>
    %c0_8 = arith.constant 0 : index
    %c0_9 = arith.constant 0 : index
    %17 = vector.load %arg5[%c0_8, %c0_9] : memref<8x128xf32, #tpu.memory_space<vmem>>, vector<8x128xf32>
    tpu.vector_store %arg5[%c0_8, %c0_9], %16 {strides = array<i32>} : memref<8x128xf32, #tpu.memory_space<vmem>>, vector<8x128xf32>,
    return
  }
  func.func @transform_0(%arg0: i32) -> (i32, i32) {
    %c0_i32 = arith.constant 0 : i32
    %c0_i32_0 = arith.constant 0 : i32
    return %arg0, %c0_i32 : i32, i32
  }
  func.func @transform_1(%arg0: i32) -> (i32, i32) {
    %c0_i32 = arith.constant 0 : i32
    %c0_i32_0 = arith.constant 0 : i32
    return %arg0, %c0_i32 : i32, i32
  }
  func.func @transform_2(%arg0: i32) -> (i32, i32) {
    %c0_i32 = arith.constant 0 : i32
    %c0_i32_0 = arith.constant 0 : i32
    %c0_i32_1 = arith.constant 0 : i32
    return %c0_i32, %c0_i32_0 : i32, i32
  }
  func.func @transform_3(%arg0: i32) -> (i32, i32) {
    %c0_i32 = arith.constant 0 : i32
    %c0_i32_0 = arith.constant 0 : i32
    %c0_i32_1 = arith.constant 0 : i32
    return %c0_i32, %c0_i32_0 : i32, i32
  }
  func.func @transform_4(%arg0: i32) -> (i32, i32) {
    %c0_i32 = arith.constant 0 : i32
    %c0_i32_0 = arith.constant 0 : i32
    return %arg0, %c0_i32 : i32, i32
  }
}

</mosaic_0001>

<llo_original>
// kernel: tpu_custom_call.1
$region0: #{tpu_custom_call.1}
  #allocation0 [shape = 'u32[]', space=smem, size = 0x4, offset = 0x4, fixed_abs, tag = 'smem constant byte address 0x4 - core index']
  #allocation1 [shape = 'u32[144,128]{1,0:T(1,128)}', space=vmem, size = 0x12000, scoped, tag = 'internal scratch']
  %s0 = inlined_call_operand.vmem [shape: s32[8,1], index: 0, kind: input, shape index: {}]
  %s1 = inlined_call_operand.vmem [shape: s32[8,1], index: 1, kind: input, shape index: {}]
  %s2 = inlined_call_operand.vmem [shape: f32[16,128], index: 2, kind: input, shape index: {}]
  %s3 = inlined_call_operand.hbm [shape: f32[32,128], index: 3, kind: input, shape index: {}]
  %s4 = inlined_call_operand.hbm [shape: f32[8,128], index: 4, kind: output, shape index: {}]
  %s5 = sld [smem:[#allocation0]]
  $region30: #{tpu_custom_call.1} parent=0
    _
  %s7 = ssub.s32 1, %s5
  %s8 = scalar_select 0, %s7, %s5
  $region1: #{tpu_custom_call.1} parent=0
    #allocation2 [shape = 'u8[16384]{0}', space=vmem, size = 0x4000, scoped, tag = 'input window, operand 3, single buffered']
    #allocation3 [shape = 's32[1]{0}', space=sflag, size = 0x4, scoped, tag = 'scoped memory for tpu_custom_call.1']
    #allocation4 [shape = 's32[1]{0}', space=sflag, size = 0x4, scoped, tag = 'scoped memory for tpu_custom_call.1']
    #allocation5 [shape = 'u8[4096]{0}', space=vmem, size = 0x1000, scoped, tag = 'output window, operand 0, single buffered']
    %9 = vsyncpa [#allocation3], 0
    %10 = vsyncpa [#allocation4], 0
    // Predicated region
    $region2: #{tpu_custom_call.1} parent=1 // pred_check
      _
    $region3: #{tpu_custom_call.1} parent=1 // pred_check_branch
      %12 = sbr.rel (0) target = $region5
    $region4: #{tpu_custom_call.1} parent=1 // pred_region
      _
    $region5: #{tpu_custom_call.1} parent=1 // pred_fallthru
      _
    // Predicated region
    $region6: #{tpu_custom_call.1} parent=1 // pred_check
      _
    $region7: #{tpu_custom_call.1} parent=1 // pred_check_branch
      %14 = sbr.rel (0) target = $region9
    $region8: #{tpu_custom_call.1} parent=1 // pred_region
      _
    $region9: #{tpu_custom_call.1} parent=1 // pred_fallthru
      _
    // Predicated region
    $region10: #{tpu_custom_call.1} parent=1 // pred_check
      _
    $region11: #{tpu_custom_call.1} parent=1 // pred_check_branch
      %16 = sbr.rel (0) target = $region13
    $region12: #{tpu_custom_call.1} parent=1 // pred_region
      _
    $region13: #{tpu_custom_call.1} parent=1 // pred_fallthru
      _
    // Predicated region
    $region14: #{tpu_custom_call.1} parent=1 // pred_check
      _
    $region15: #{tpu_custom_call.1} parent=1 // pred_check_branch
      %18 = sbr.rel (0) target = $region17
    $region16: #{tpu_custom_call.1} parent=1 // pred_region
      %s20 = ssub.s32 512, 512
      %21 = vsyncadd [#allocation3], %s20
      %s22 = sshll.u32 [#allocation2], 4
      %s23 = int_to_ptr.vmem [resolvable:$true] %s22
      %28 = dma.hbm_to_vmem [thread:$0]  %s3, 512, %s23, [#allocation3], 128, 128, 8
    $region17: #{tpu_custom_call.1} parent=1 // pred_fallthru
      _
    // Predicated region
    $region18: #{tpu_custom_call.1} parent=1 // pred_check
      _
    $region19: #{tpu_custom_call.1} parent=1 // pred_check_branch
      %30 = sbr.rel (0) target = $region21
    $region20: #{tpu_custom_call.1} parent=1 // pred_region
      %31 = dma.done [#allocation3], 512
    $region21: #{tpu_custom_call.1} parent=1 // pred_fallthru
      _
    %v32 = vld [vmem:[%s0] sm:$0xff]
    %v33 = vld [vmem:[%s1] sm:$0xff]
    %v34 = vlaneseq
    %v35 = vand.u32 %v34, 127
    %36 = vset.pattern.permute.xlu0 0
    %37 = vperm.xlu0 %36, %v32
    %v38 = vpop.permute.xlu0 %37
    %vm39 = vcmp.eq.s32.totalorder %v35, %v38
    %v40 = vsel %vm39, 1, 0
    %v41 = vcvt.s32.f32 %v40
    %42 = vset.pattern.permute.xlu0 0
    %43 = vperm.xlu0 %42, %v33
    %v44 = vpop.permute.xlu0 %43
    %vm45 = vcmp.eq.s32.totalorder %v35, %v44
    %v46 = vsel %vm45, 1, 0
    %v47 = vcvt.s32.f32 %v46
    %v48 = vld [vmem:[%s2] sm:$0xff]
    %v49 = vld [vmem:[%s2 + $0x8] sm:$0xff]
    %vm50 = vcmask 130048
    %v52 = vsel %vm50, %v41, 0
    %54 = vmatprep.subr.mxu0 0.0
    %55 = vmatpush1.msra.mxu0 %v48
    %56 = vmatprep.subr.mxu0 0.0
    %57 = vmatpush1.msra.mxu0 %v49
    %58 = vmatprep.subr.mxu0 0.0
    %59 = vmatpush1.msra.mxu0 0.0
    %60 = vmatprep.subr.mxu0 0.0
    %61 = vmatpush1.msra.mxu0 0.0
    %62 = vmatprep.subr.mxu0 0.0
    %63 = vmatpush1.msra.mxu0 0.0
    %64 = vmatprep.subr.mxu0 0.0
    %65 = vmatpush1.msra.mxu0 0.0
    %66 = vmatprep.subr.mxu0 0.0
    %67 = vmatpush1.msra.mxu0 0.0
    %68 = vmatprep.subr.mxu0 0.0
    %69 = vmatpush1.msra.mxu0 0.0
    %70 = vmatprep.subr.mxu0 0.0
    %71 = vmatpush1.msra.mxu0 0.0
    %72 = vmatprep.subr.mxu0 0.0
    %73 = vmatpush1.msra.mxu0 0.0
    %74 = vmatprep.subr.mxu0 0.0
    %75 = vmatpush1.msra.mxu0 0.0
    %76 = vmatprep.subr.mxu0 0.0
    %77 = vmatpush1.msra.mxu0 0.0
    %78 = vmatprep.subr.mxu0 0.0
    %79 = vmatpush1.msra.mxu0 0.0
    %80 = vmatprep.subr.mxu0 0.0
    %81 = vmatpush1.msra.mxu0 0.0
    %82 = vmatprep.subr.mxu0 0.0
    %83 = vmatpush1.msra.mxu0 0.0
    %84 = vmatprep.subr.mxu0 0.0
    %85 = vmatpush1.msra.mxu0 0.0
    %86 = vmatprep.subr.mxu0 0.0
    %87 = vmatpush1.msra.mxu0 0.0
    %88 = vmatprep.subr.mxu0 0.0
    %89 = vmatpush1.msra.mxu0 0.0
    %90 = vmatprep.subr.mxu0 0.0
    %91 = vmatpush1.msra.mxu0 0.0
    %92 = vmatprep.subr.mxu0 0.0
    %93 = vmatpush1.msra.mxu0 0.0
    %94 = vmatprep.subr.mxu0 0.0
    %95 = vmatpush1.msra.mxu0 0.0
    %96 = vmatprep.subr.mxu0 0.0
    %97 = vmatpush1.msra.mxu0 0.0
    %98 = vmatprep.subr.mxu0 0.0
    %99 = vmatpush1.msra.mxu0 0.0
    %100 = vmatprep.subr.mxu0 0.0
    %101 = vmatpush1.msra.mxu0 0.0
    %102 = vmatprep.subr.mxu0 0.0
    %103 = vmatpush1.msra.mxu0 0.0
    %104 = vmatprep.subr.mxu0 0.0
    %105 = vmatpush1.msra.mxu0 0.0
    %106 = vmatprep.subr.mxu0 0.0
    %107 = vmatpush1.msra.mxu0 0.0
    %108 = vmatprep.subr.mxu0 0.0
    %109 = vmatpush1.msra.mxu0 0.0
    %110 = vmatprep.subr.mxu0 0.0
    %111 = vmatpush1.msra.mxu0 0.0
    %112 = vmatprep.subr.mxu0 0.0
    %113 = vmatpush1.msra.mxu0 0.0
    %114 = vmatprep.subr.mxu0 0.0
    %115 = vmatpush1.msra.mxu0 0.0
    %116 = vmatprep.subr.mxu0 0.0
    %117 = vmatpush1.msra.mxu0 0.0
    %118 = vmatprep.mubr.f32.mxu0 0.0
    %119 = vmatmul.mubr.f32.gmra.mrb[0].mxu0 %v52
    %v120 = vpop.f32.mrb[0].mxu0
    %v121 = vadd.f32 0.0, %v120
    %v122 = vpop.f32.mrb[0].mxu0
    %123 = vdwg.mxu0
    %v124 = vld [vmem:[#allocation2] sm:$0xff]
    %v125 = vld [vmem:[#allocation2 + $0x8] sm:$0xff]
    %v126 = vld [vmem:[#allocation2 + $0x10] sm:$0xff]
    %v127 = vld [vmem:[#allocation2 + $0x18] sm:$0xff]
    %vm128 = vcmask 261120
    %v130 = vsel %vm128, %v47, 0
    %132 = vmatprep.subr.mxu0 0.0
    %133 = vmatpush1.msra.mxu0 %v124
    %134 = vmatprep.subr.mxu0 0.0
    %135 = vmatpush1.msra.mxu0 %v125
    %136 = vmatprep.subr.mxu0 0.0
    %137 = vmatpush1.msra.mxu0 %v126
    %138 = vmatprep.subr.mxu0 0.0
    %139 = vmatpush1.msra.mxu0 %v127
    %140 = vmatprep.subr.mxu0 0.0
    %141 = vmatpush1.msra.mxu0 0.0
    %142 = vmatprep.subr.mxu0 0.0
    %143 = vmatpush1.msra.mxu0 0.0
    %144 = vmatprep.subr.mxu0 0.0
    %145 = vmatpush1.msra.mxu0 0.0
    %146 = vmatprep.subr.mxu0 0.0
    %147 = vmatpush1.msra.mxu0 0.0
    %148 = vmatprep.subr.mxu0 0.0
    %149 = vmatpush1.msra.mxu0 0.0
    %150 = vmatprep.subr.mxu0 0.0
    %151 = vmatpush1.msra.mxu0 0.0
    %152 = vmatprep.subr.mxu0 0.0
    %153 = vmatpush1.msra.mxu0 0.0
    %154 = vmatprep.subr.mxu0 0.0
    %155 = vmatpush1.msra.mxu0 0.0
    %156 = vmatprep.subr.mxu0 0.0
    %157 = vmatpush1.msra.mxu0 0.0
    %158 = vmatprep.subr.mxu0 0.0
    %159 = vmatpush1.msra.mxu0 0.0
    %160 = vmatprep.subr.mxu0 0.0
    %161 = vmatpush1.msra.mxu0 0.0
    %162 = vmatprep.subr.mxu0 0.0
    %163 = vmatpush1.msra.mxu0 0.0
    %164 = vmatprep.subr.mxu0 0.0
    %165 = vmatpush1.msra.mxu0 0.0
    %166 = vmatprep.subr.mxu0 0.0
    %167 = vmatpush1.msra.mxu0 0.0
    %168 = vmatprep.subr.mxu0 0.0
    %169 = vmatpush1.msra.mxu0 0.0
    %170 = vmatprep.subr.mxu0 0.0
    %171 = vmatpush1.msra.mxu0 0.0
    %172 = vmatprep.subr.mxu0 0.0
    %173 = vmatpush1.msra.mxu0 0.0
    %174 = vmatprep.subr.mxu0 0.0
    %175 = vmatpush1.msra.mxu0 0.0
    %176 = vmatprep.subr.mxu0 0.0
    %177 = vmatpush1.msra.mxu0 0.0
    %178 = vmatprep.subr.mxu0 0.0
    %179 = vmatpush1.msra.mxu0 0.0
    %180 = vmatprep.subr.mxu0 0.0
    %181 = vmatpush1.msra.mxu0 0.0
    %182 = vmatprep.subr.mxu0 0.0
    %183 = vmatpush1.msra.mxu0 0.0
    %184 = vmatprep.subr.mxu0 0.0
    %185 = vmatpush1.msra.mxu0 0.0
    %186 = vmatprep.subr.mxu0 0.0
    %187 = vmatpush1.msra.mxu0 0.0
    %188 = vmatprep.subr.mxu0 0.0
    %189 = vmatpush1.msra.mxu0 0.0
    %190 = vmatprep.subr.mxu0 0.0
    %191 = vmatpush1.msra.mxu0 0.0
    %192 = vmatprep.subr.mxu0 0.0
    %193 = vmatpush1.msra.mxu0 0.0
    %194 = vmatprep.subr.mxu0 0.0
    %195 = vmatpush1.msra.mxu0 0.0
    %196 = vmatprep.mubr.f32.mxu0 0.0
    %197 = vmatmul.mubr.f32.gmra.mrb[0].mxu0 %v130
    %v198 = vpop.f32.mrb[0].mxu0
    %v199 = vadd.f32 0.0, %v198
    %v200 = vpop.f32.mrb[0].mxu0
    %201 = vdwg.mxu0
    %v202 = vmul.f32 %v121, %v199
    %203 = vst [vmem:[#allocation5] sm:$0xff] %v202
    // Predicated region
    $region22: #{tpu_custom_call.1} parent=1 // pred_check
      _
    $region23: #{tpu_custom_call.1} parent=1 // pred_check_branch
      %205 = sbr.rel (0) target = $region25
    $region24: #{tpu_custom_call.1} parent=1 // pred_region
      %s207 = ssub.s32 128, 128
      %208 = vsyncadd [#allocation4], %s207
      %s210 = sshll.u32 [#allocation5], 4
      %s211 = int_to_ptr.vmem [resolvable:$true] %s210
      %213 = dma.vmem_to_hbm [thread:$0]  %s211, 128, %s4, [#allocation4]
    $region25: #{tpu_custom_call.1} parent=1 // pred_fallthru
      _
    // Predicated region
    $region26: #{tpu_custom_call.1} parent=1 // pred_check
      _
    $region27: #{tpu_custom_call.1} parent=1 // pred_check_branch
      %215 = sbr.rel (0) target = $region29
    $region28: #{tpu_custom_call.1} parent=1 // pred_region
      %216 = dma.done [#allocation4], 128
    $region29: #{tpu_custom_call.1} parent=1 // pred_fallthru
      _
    %217 = vsyncpa [#allocation3], 1
    %218 = vsyncpa [#allocation4], 1

</llo_original>
